<compile_context>
chip_gen: v6e
topology: v6e:2x2x1
jax: 0.10.0
libtpu: 0.0.40
codegen_flags: <defaults>
</compile_context>

<pallas_src>
import functools

import jax
import jax.numpy as jnp
from jax.experimental import pallas as pl
from jax.experimental.pallas import tpu as pltpu


# ---------------- hyper-parameters (deterministic, from module __init__) ----
NUM_CLASSES = 14
NUM_HEADS = 3
MOMENTUM = 0.9
ADJUSTMENT_WEIGHT = 0.1
SHARPEN_TEMPERATURE = 0.5  # T used inside sharpen(...)


def _ours_loss_local_kernel(head_id_ref, prob_ref, anchors_ref, neighbors_ref,
                            loss_ref, new_prob_ref,
                            *, momentum, adjustment_weight, inv_t):
    h = head_id_ref[0]                        # SMEM scalar (head index)
    prob = prob_ref[...]                      # (H, C) full prob_ema buffer
    anchors = anchors_ref[...]                # (B, C) logits
    neighbors = neighbors_ref[...]            # (B, C) logits
    b = anchors.shape[0]

    # --- gather prob_ema[head_id] with a row mask (vector-only, no dyn slice)
    row_ids = jax.lax.broadcasted_iota(jnp.int32, prob.shape, 0)
    head_mask = row_ids == h
    ema = jnp.sum(jnp.where(head_mask, prob, 0.0), axis=0, keepdims=True)  # (1,C)
    log_ema = jnp.log(ema)

    # --- softmax(neighbors)  (positives_original_prob; EMA update only)
    m_n = jnp.max(neighbors, axis=-1, keepdims=True)
    en = jnp.exp(neighbors - m_n)                              # BxC exp (1/2)
    sum_n = jnp.sum(en, axis=-1, keepdims=True)
    positives_original_prob = en * pl.reciprocal(sum_n, approx=True)

    # --- neighbors_adjusted = neighbors - w*log(ema):
    #     reuse `en` via the (1, C) row factor ema**(-w) (no second BxC exp).
    scale = jnp.exp(-adjustment_weight * log_ema)              # (1, C) exp
    ea = en * scale                                            # exp(adj - m_n)
    log_ea = (neighbors - m_n) - adjustment_weight * log_ema   # log(ea), exact

    # --- log_softmax(anchors)
    m_a = jnp.max(anchors, axis=-1, keepdims=True)
    e_anc = jnp.exp(anchors - m_a)                             # BxC exp (2/2)
    sum_anc = jnp.sum(e_anc, axis=-1, keepdims=True)
    log_anchors_prob = (anchors - m_a) - jnp.log(sum_anc)

    # --- EMA buffer update (detached mean over batch) + renormalize, then
    #     scatter the row back into the (aliased) full buffer.
    #     Exact divide here: this is persistent state, keep it drift-free.
    new_ema = ema * momentum + jnp.mean(
        positives_original_prob, axis=0, keepdims=True) * (1.0 - momentum)
    new_ema = new_ema / jnp.sum(new_ema, keepdims=True)
    new_prob_ref[...] = jnp.where(head_mask, new_ema, prob)

    # --- sharpen(softmax(neighbors_adjusted), T) in log space.
    #     The softmax denominator cancels inside sharpen, so work with `ea`
    #     directly:  sharp = ea**(1/T) / sum(ea**(1/T)).
    if inv_t == 2.0:
        sharp_un = ea * ea                                     # pure VPU square
        log_sharp_un = 2.0 * log_ea
    else:
        z = inv_t * log_ea
        mz = jnp.max(z, axis=-1, keepdims=True)
        sharp_un = jnp.exp(z - mz)
        log_sharp_un = z - mz
    sum_s = jnp.sum(sharp_un, axis=-1, keepdims=True)
    sharp = sharp_un * pl.reciprocal(sum_s, approx=True)
    log_sharp = log_sharp_un - jnp.log(sum_s)

    # --- F.kl_div(log_anchors_prob, sharp, reduction='batchmean')
    #     = sum( target * (log(target) - input) ) / B ; underflowed targets
    #     contribute 0 * finite = 0 (matches PyTorch's zero-target handling).
    kl_rows = jnp.sum(sharp * (log_sharp - log_anchors_prob),
                      axis=-1, keepdims=True)                  # (B, 1)
    loss_ref[...] = jnp.sum(kl_rows, axis=0, keepdims=True) * (1.0 / b)


def ours_loss_local(prob_ema, head_id, anchors, neighbors,
                    momentum=MOMENTUM,
                    adjustment_weight=ADJUSTMENT_WEIGHT,
                    sharpen_temperature=SHARPEN_TEMPERATURE):
    """Returns (total_loss: f32 scalar, updated prob_ema: [num_heads, num_classes])."""
    b, c = anchors.shape
    h, _ = prob_ema.shape
    head_id_arr = jnp.asarray(head_id, dtype=jnp.int32).reshape((1,))

    kernel = functools.partial(
        _ours_loss_local_kernel,
        momentum=float(momentum),
        adjustment_weight=float(adjustment_weight),
        inv_t=1.0 / float(sharpen_temperature),
    )

    cost = pl.CostEstimate(
        flops=30 * b * c + 10 * h * c,
        transcendentals=2 * b * c + 4 * c + 4 * b,
        bytes_accessed=4 * (2 * b * c + 2 * h * c + 1),
    )

    loss, new_prob_ema = pl.pallas_call(
        kernel,
        out_shape=(
            jax.ShapeDtypeStruct((1, 1), jnp.float32),       # loss
            jax.ShapeDtypeStruct((h, c), prob_ema.dtype),    # updated prob_ema
        ),
        in_specs=[
            pl.BlockSpec(memory_space=pltpu.MemorySpace.SMEM),   # head_id
            pl.BlockSpec(memory_space=pltpu.MemorySpace.VMEM),   # prob_ema
            pl.BlockSpec(memory_space=pltpu.MemorySpace.VMEM),   # anchors
            pl.BlockSpec(memory_space=pltpu.MemorySpace.VMEM),   # neighbors
        ],
        out_specs=(
            pl.BlockSpec(memory_space=pltpu.MemorySpace.VMEM),
            pl.BlockSpec(memory_space=pltpu.MemorySpace.VMEM),
        ),
        input_output_aliases={1: 1},   # prob_ema buffer is updated in place
        cost_estimate=cost,
    )(head_id_arr, prob_ema, anchors, neighbors)

    return loss[0, 0], new_prob_ema


def _reference(prob_ema, head_id, anchors, neighbors,
               momentum=MOMENTUM, adjustment_weight=ADJUSTMENT_WEIGHT,
               sharpen_temperature=SHARPEN_TEMPERATURE):
    """Pure-JAX transcription of the PyTorch module (for verification)."""
    ema = prob_ema[head_id]
    adj = neighbors - adjustment_weight * jnp.log(ema)[None, :]
    positives_prob = jax.nn.softmax(adj, axis=1)
    log_anchors_prob = jax.nn.log_softmax(anchors, axis=1)
    positives_original_prob = jax.nn.softmax(neighbors, axis=1)
    new_ema = ema * momentum + positives_original_prob.mean(axis=0) * (1.0 - momentum)
    new_ema = new_ema / new_ema.sum()
    new_prob_ema = prob_ema.at[head_id].set(new_ema)
    sharp = positives_prob ** (1.0 / sharpen_temperature)
    sharp = sharp / sharp.sum(axis=1, keepdims=True)
    kl = jnp.sum(sharp * (jnp.log(sharp) - log_anchors_prob)) / anchors.shape[0]
    return kl, new_prob_ema


if __name__ == "__main__":
    key = jax.random.PRNGKey(0)
    k1, k2 = jax.random.split(key)

    B = 8
    anchors = jax.random.normal(k1, (B, NUM_CLASSES), dtype=jnp.float32)
    neighbors = jax.random.normal(k2, (B, NUM_CLASSES), dtype=jnp.float32)

    # buffer init: prob_ema = ones(num_heads, num_classes) / num_classes
    prob_ema = jnp.ones((NUM_HEADS, NUM_CLASSES), dtype=jnp.float32) / NUM_CLASSES
    head_id = 1

    fn = jax.jit(ours_loss_local)
    loss, new_prob_ema = fn(prob_ema, head_id, anchors, neighbors)
    jax.block_until_ready((loss, new_prob_ema))

    ref_loss, ref_prob_ema = _reference(prob_ema, head_id, anchors, neighbors)
    assert jnp.allclose(loss, ref_loss, rtol=2e-2, atol=2e-3), (loss, ref_loss)
    assert jnp.allclose(new_prob_ema, ref_prob_ema, rtol=2e-2, atol=2e-3)

    print("KERNEL_OK")
</pallas_src>

<mosaic_0001>
module attributes {stable_mosaic.version = 11 : i64} {
  func.func @_ours_loss_local_kernel(%arg0: memref<1xi32, #tpu.memory_space<smem>>, %arg1: memref<3x14xf32, #tpu.memory_space<vmem>>, %arg2: memref<8x14xf32, #tpu.memory_space<vmem>>, %arg3: memref<8x14xf32, #tpu.memory_space<vmem>>, %arg4: memref<1x1xf32, #tpu.memory_space<vmem>>, %arg5: memref<3x14xf32, #tpu.memory_space<vmem>>) attributes {dimension_semantics = [], scalar_prefetch = 0 : i64, scratch_operands = 0 : i64, tpu.core_type = #tpu.core_type<tc>} {
    %c0 = arith.constant 0 : index
    %0 = memref.load %arg0[%c0] : memref<1xi32, #tpu.memory_space<smem>>
    %c0_0 = arith.constant 0 : index
    %c0_1 = arith.constant 0 : index
    %1 = vector.load %arg1[%c0_0, %c0_1] : memref<3x14xf32, #tpu.memory_space<vmem>>, vector<3x14xf32>
    %c0_2 = arith.constant 0 : index
    %c0_3 = arith.constant 0 : index
    %2 = vector.load %arg2[%c0_2, %c0_3] : memref<8x14xf32, #tpu.memory_space<vmem>>, vector<8x14xf32>
    %c0_4 = arith.constant 0 : index
    %c0_5 = arith.constant 0 : index
    %3 = vector.load %arg3[%c0_4, %c0_5] : memref<8x14xf32, #tpu.memory_space<vmem>>, vector<8x14xf32>
    %4 = tpu.iota {dimensions = array<i32: 0>} : vector<3x14xi32>
    %5 = vector.broadcast %0 : i32 to vector<3x14xi32>
    %6 = arith.cmpi eq, %4, %5 : vector<3x14xi32>
    %cst = arith.constant 0.000000e+00 : f32
    %7 = vector.broadcast %cst : f32 to vector<3x14xf32>
    %8 = arith.select %6, %1, %7 : vector<3x14xi1>, vector<3x14xf32>
    %cst_6 = arith.constant dense<0.000000e+00> : vector<14xf32>
    %9 = vector.multi_reduction <add>, %8, %cst_6 [0] : vector<3x14xf32> to vector<14xf32>
    %10 = vector.shape_cast %9 : vector<14xf32> to vector<1x14xf32>
    %11 = math.log %10 : vector<1x14xf32>
    %cst_7 = arith.constant dense<0xFF800000> : vector<8xf32>
    %12 = vector.multi_reduction <maximumf>, %3, %cst_7 [1] : vector<8x14xf32> to vector<8xf32>
    %13 = vector.shape_cast %12 : vector<8xf32> to vector<8x1xf32>
    %14 = vector.broadcast %13 : vector<8x1xf32> to vector<8x14xf32>
    %15 = arith.subf %3, %14 : vector<8x14xf32>
    %16 = math.exp %15 : vector<8x14xf32>
    %cst_8 = arith.constant dense<0.000000e+00> : vector<8xf32>
    %17 = vector.multi_reduction <add>, %16, %cst_8 [1] : vector<8x14xf32> to vector<8xf32>
    %18 = vector.shape_cast %17 : vector<8xf32> to vector<8x1xf32>
    %19 = tpu.reciprocal %18 {approx = true} : vector<8x1xf32> -> vector<8x1xf32>
    %20 = vector.broadcast %19 : vector<8x1xf32> to vector<8x14xf32>
    %21 = arith.mulf %16, %20 : vector<8x14xf32>
    %cst_9 = arith.constant -1.000000e-01 : f32
    %22 = vector.broadcast %cst_9 : f32 to vector<1x14xf32>
    %23 = arith.mulf %22, %11 : vector<1x14xf32>
    %24 = math.exp %23 : vector<1x14xf32>
    %25 = vector.broadcast %24 : vector<1x14xf32> to vector<8x14xf32>
    %26 = arith.mulf %16, %25 : vector<8x14xf32>
    %27 = vector.broadcast %13 : vector<8x1xf32> to vector<8x14xf32>
    %28 = arith.subf %3, %27 : vector<8x14xf32>
    %cst_10 = arith.constant 1.000000e-01 : f32
    %29 = vector.broadcast %cst_10 : f32 to vector<1x14xf32>
    %30 = arith.mulf %29, %11 : vector<1x14xf32>
    %31 = vector.broadcast %30 : vector<1x14xf32> to vector<8x14xf32>
    %32 = arith.subf %28, %31 : vector<8x14xf32>
    %cst_11 = arith.constant dense<0xFF800000> : vector<8xf32>
    %33 = vector.multi_reduction <maximumf>, %2, %cst_11 [1] : vector<8x14xf32> to vector<8xf32>
    %34 = vector.shape_cast %33 : vector<8xf32> to vector<8x1xf32>
    %35 = vector.broadcast %34 : vector<8x1xf32> to vector<8x14xf32>
    %36 = arith.subf %2, %35 : vector<8x14xf32>
    %37 = math.exp %36 : vector<8x14xf32>
    %cst_12 = arith.constant dense<0.000000e+00> : vector<8xf32>
    %38 = vector.multi_reduction <add>, %37, %cst_12 [1] : vector<8x14xf32> to vector<8xf32>
    %39 = vector.shape_cast %38 : vector<8xf32> to vector<8x1xf32>
    %40 = vector.broadcast %34 : vector<8x1xf32> to vector<8x14xf32>
    %41 = arith.subf %2, %40 : vector<8x14xf32>
    %42 = math.log %39 : vector<8x1xf32>
    %43 = vector.broadcast %42 : vector<8x1xf32> to vector<8x14xf32>
    %44 = arith.subf %41, %43 : vector<8x14xf32>
    %cst_13 = arith.constant 0.899999976 : f32
    %45 = vector.broadcast %cst_13 : f32 to vector<1x14xf32>
    %46 = arith.mulf %10, %45 : vector<1x14xf32>
    %cst_14 = arith.constant dense<0.000000e+00> : vector<14xf32>
    %47 = vector.multi_reduction <add>, %21, %cst_14 [0] : vector<8x14xf32> to vector<14xf32>
    %48 = vector.shape_cast %47 : vector<14xf32> to vector<1x14xf32>
    %cst_15 = arith.constant 8.000000e+00 : f32
    %49 = vector.broadcast %cst_15 : f32 to vector<1x14xf32>
    %50 = arith.divf %48, %49 : vector<1x14xf32>
    %cst_16 = arith.constant 1.000000e-01 : f32
    %51 = vector.broadcast %cst_16 : f32 to vector<1x14xf32>
    %52 = arith.mulf %50, %51 : vector<1x14xf32>
    %53 = arith.addf %46, %52 : vector<1x14xf32>
    %54 = vector.shape_cast %53 : vector<1x14xf32> to vector<1x1x14xf32>
    %cst_17 = arith.constant dense<0.000000e+00> : vector<1xf32>
    %55 = vector.multi_reduction <add>, %54, %cst_17 [1, 2] : vector<1x1x14xf32> to vector<1xf32>
    %56 = vector.shape_cast %55 : vector<1xf32> to vector<1x1x1xf32>
    %57 = vector.extract %56[0, 0, 0] : f32 from vector<1x1x1xf32>
    %58 = vector.broadcast %57 : f32 to vector<1x1xf32>
    %59 = vector.broadcast %58 : vector<1x1xf32> to vector<1x14xf32>
    %60 = arith.divf %53, %59 : vector<1x14xf32>
    %61 = vector.shape_cast %60 : vector<1x14xf32> to vector<1x14xf32>
    %62 = vector.broadcast %61 : vector<1x14xf32> to vector<3x14xf32>
    %63 = arith.select %6, %62, %1 : vector<3x14xi1>, vector<3x14xf32>
    %c0_18 = arith.constant 0 : index
    %c0_19 = arith.constant 0 : index
    %64 = vector.load %arg5[%c0_18, %c0_19] : memref<3x14xf32, #tpu.memory_space<vmem>>, vector<3x14xf32>
    tpu.vector_store %arg5[%c0_18, %c0_19], %63 {strides = array<i32>} : memref<3x14xf32, #tpu.memory_space<vmem>>, vector<3x14xf32>,
    %65 = arith.mulf %26, %26 : vector<8x14xf32>
    %cst_20 = arith.constant 2.000000e+00 : f32
    %66 = vector.broadcast %cst_20 : f32 to vector<8x14xf32>
    %67 = arith.mulf %66, %32 : vector<8x14xf32>
    %cst_21 = arith.constant dense<0.000000e+00> : vector<8xf32>
    %68 = vector.multi_reduction <add>, %65, %cst_21 [1] : vector<8x14xf32> to vector<8xf32>
    %69 = vector.shape_cast %68 : vector<8xf32> to vector<8x1xf32>
    %70 = tpu.reciprocal %69 {approx = true} : vector<8x1xf32> -> vector<8x1xf32>
    %71 = vector.broadcast %70 : vector<8x1xf32> to vector<8x14xf32>
    %72 = arith.mulf %65, %71 : vector<8x14xf32>
    %73 = math.log %69 : vector<8x1xf32>
    %74 = vector.broadcast %73 : vector<8x1xf32> to vector<8x14xf32>
    %75 = arith.subf %67, %74 : vector<8x14xf32>
    %76 = arith.subf %75, %44 : vector<8x14xf32>
    %77 = arith.mulf %72, %76 : vector<8x14xf32>
    %cst_22 = arith.constant dense<0.000000e+00> : vector<8xf32>
    %78 = vector.multi_reduction <add>, %77, %cst_22 [1] : vector<8x14xf32> to vector<8xf32>
    %79 = vector.shape_cast %78 : vector<8xf32> to vector<8x1xf32>
    %cst_23 = arith.constant dense<0.000000e+00> : vector<1xf32>
    %80 = vector.multi_reduction <add>, %79, %cst_23 [0] : vector<8x1xf32> to vector<1xf32>
    %81 = vector.shape_cast %80 : vector<1xf32> to vector<1x1xf32>
    %cst_24 = arith.constant 1.250000e-01 : f32
    %82 = vector.broadcast %cst_24 : f32 to vector<1x1xf32>
    %83 = arith.mulf %81, %82 : vector<1x1xf32>
    %c0_25 = arith.constant 0 : index
    %c0_26 = arith.constant 0 : index
    %84 = vector.load %arg4[%c0_25, %c0_26] : memref<1x1xf32, #tpu.memory_space<vmem>>, vector<1x1xf32>
    tpu.vector_store %arg4[%c0_25, %c0_26], %83 {strides = array<i32>} : memref<1x1xf32, #tpu.memory_space<vmem>>, vector<1x1xf32>,
    return
  }
}

</mosaic_0001>

<llo_original>
// kernel: ours_loss_local.1
$region0: #{ours_loss_local.1}
  #allocation0 [shape = 'u32[]', space=smem, size = 0x4, offset = 0x4, fixed_abs, tag = 'smem constant byte address 0x4 - core index']
  #allocation1 [shape = 'u32[144,128]{1,0:T(1,128)}', space=vmem, size = 0x12000, scoped, tag = 'internal scratch']
  #allocation2 [shape = 's32[1]{0:T(128)S(6)}', space=smem, size = 0x200, scoped, tag = 'scoped memory for ours_loss_local.1']
  %s0 = inlined_call_operand.<no memory space> [shape: s32[1], index: 0, kind: input, shape index: {}]
  %s1 = inlined_call_operand.vmem [shape: f32[3,14], index: 1, kind: input, shape index: {}, may-alias: {1,5}]
  %s2 = inlined_call_operand.vmem [shape: f32[8,14], index: 2, kind: input, shape index: {}]
  %s3 = inlined_call_operand.hbm [shape: f32[8,14], index: 3, kind: input, shape index: {}]
  %s4 = inlined_call_operand.hbm [shape: f32[1,1], index: 4, kind: output, shape index: {0}]
  %s5 = inlined_call_operand.vmem [shape: f32[3,14], index: 5, kind: output, shape index: {1}, may-alias: {1,5}]
  %6 = xla_tuple %s4, %s5
  %s7 = sld [smem:[#allocation0]]
  $region38: #{ours_loss_local.1} parent=0
    _
  %s9 = ssub.s32 1, %s7
  %s10 = scalar_select 0, %s9, %s7
  %11 = sst [smem:[#allocation2]] %s0
  $region1: #{ours_loss_local.1} parent=0
    #allocation3 [shape = 'u8[4096]{0}', space=vmem, size = 0x1000, scoped, tag = 'input window, operand 3, single buffered']
    #allocation4 [shape = 's32[1]{0}', space=sflag, size = 0x4, scoped, tag = 'scoped memory for ours_loss_local.1']
    #allocation5 [shape = 's32[1]{0}', space=sflag, size = 0x4, scoped, tag = 'scoped memory for ours_loss_local.1']
    #allocation6 [shape = 'u8[512]{0}', space=vmem, size = 0x400, scoped, tag = 'output window, operand 0, single buffered']
    %12 = vsyncpa [#allocation4], 0
    %13 = vsyncpa [#allocation5], 0
    // Predicated region
    $region2: #{ours_loss_local.1} parent=1 // pred_check
      _
    $region3: #{ours_loss_local.1} parent=1 // pred_check_branch
      %15 = sbr.rel (0) target = $region5
    $region4: #{ours_loss_local.1} parent=1 // pred_region
      _
    $region5: #{ours_loss_local.1} parent=1 // pred_fallthru
      _
    // Predicated region
    $region6: #{ours_loss_local.1} parent=1 // pred_check
      _
    $region7: #{ours_loss_local.1} parent=1 // pred_check_branch
      %17 = sbr.rel (0) target = $region9
    $region8: #{ours_loss_local.1} parent=1 // pred_region
      _
    $region9: #{ours_loss_local.1} parent=1 // pred_fallthru
      _
    // Predicated region
    $region10: #{ours_loss_local.1} parent=1 // pred_check
      _
    $region11: #{ours_loss_local.1} parent=1 // pred_check_branch
      %19 = sbr.rel (0) target = $region13
    $region12: #{ours_loss_local.1} parent=1 // pred_region
      _
    $region13: #{ours_loss_local.1} parent=1 // pred_fallthru
      _
    // Predicated region
    $region14: #{ours_loss_local.1} parent=1 // pred_check
      _
    $region15: #{ours_loss_local.1} parent=1 // pred_check_branch
      %21 = sbr.rel (0) target = $region17
    $region16: #{ours_loss_local.1} parent=1 // pred_region
      %s23 = ssub.s32 128, 128
      %24 = vsyncadd [#allocation4], %s23
      %s26 = sshll.u32 [#allocation3], 4
      %s27 = int_to_ptr.vmem [resolvable:$true] %s26
      %29 = dma.hbm_to_vmem [thread:$0]  %s3, 128, %s27, [#allocation4]
    $region17: #{ours_loss_local.1} parent=1 // pred_fallthru
      _
    // Predicated region
    $region18: #{ours_loss_local.1} parent=1 // pred_check
      _
    $region19: #{ours_loss_local.1} parent=1 // pred_check_branch
      %31 = sbr.rel (0) target = $region21
    $region20: #{ours_loss_local.1} parent=1 // pred_region
      %32 = dma.done [#allocation4], 128
    $region21: #{ours_loss_local.1} parent=1 // pred_fallthru
      _
    %s33 = sld [smem:[#allocation2]]
    %v34 = vld [vmem:[%s1] sm:$0x7]
    %v35 = vld [vmem:[%s2] sm:$0xff]
    %v36 = vld [vmem:[#allocation3] sm:$0xff]
    %v37 = vlaneseq
    %v38 = vshrl.u32 %v37, 7
    %v39 = vstv %s33
    %vm40 = vcmp.eq.s32.totalorder %v38, %v39
    %v41 = vsel %vm40, %v34, 0.0
    %vm42 = vcmask 108544
    %v43 = vsel %vm42, %v41, 0.0
    %v44 = vrot.slane %v43, 4
    %v45 = vadd.f32 %v43, %v44
    %v46 = vrot.slane %v45, 2
    %v47 = vadd.f32 %v45, %v46
    %v48 = vrot.slane %v47, 1
    %v49 = vadd.f32 %v47, %v48
    %v50 = vlog2.pop %v49
    %v51 = vmul.f32 %v50, 0.6931472
    %vm52 = vcmask 113664
    %v53 = vsel %vm52, %v36, -inf
    %54 = vmax.xlane.f32.xlu0 %v53
    %v55 = vpop.xlane.xlu0 %54
    %v56 = vsub.f32 %v36, %v55
    %v57 = vmul.f32 %v56, 1.442695
    %v58 = vpow.pop %v57
    %v59 = vsel %vm52, %v58, 0.0
    %60 = vadd.xlane.f32.xlu0 %v59
    %v61 = vpop.xlane.xlu0 %60
    %v62 = vrcp.pop %v61
    %v63 = vmul.f32 %v58, %v62
    %v64 = vmul.f32 %v51, -0.1
    %v65 = vmul.f32 %v64, 1.442695
    %v66 = vpow.pop %v65
    %v67 = vmul.f32 %v58, %v66
    %v68 = vmul.f32 %v51, 0.1
    %v69 = vsub.f32 %v56, %v68
    %v70 = vsel %vm52, %v35, -inf
    %71 = vmax.xlane.f32.xlu0 %v70
    %v72 = vpop.xlane.xlu0 %71
    %v73 = vsub.f32 %v35, %v72
    %v74 = vmul.f32 %v73, 1.442695
    %v75 = vpow.pop %v74
    %v76 = vsel %vm52, %v75, 0.0
    %77 = vadd.xlane.f32.xlu0 %v76
    %v78 = vpop.xlane.xlu0 %77
    %v79 = vlog2.pop %v78
    %v80 = vmul.f32 %v79, 0.6931472
    %v81 = vsub.f32 %v73, %v80
    %v82 = vmul.f32 %v49, 0.9
    %v83 = vsel %vm52, %v63, 0.0
    %v84 = vrot.slane %v83, 4
    %v85 = vadd.f32 %v83, %v84
    %v86 = vrot.slane %v85, 2
    %v87 = vadd.f32 %v85, %v86
    %v88 = vrot.slane %v87, 1
    %v89 = vadd.f32 %v87, %v88
    %v90 = vrcp.pop 8.0
    %v91 = vmul.f32 %v89, %v90
    %v92 = vmul.f32 %v91, 0.1
    %v93 = vadd.f32 %v82, %v92
    %vm94 = vcmask 106496
    %v95 = vsel %vm94, %v93, 0.0
    %96 = vadd.xlane.f32.xlu0 %v95
    %v97 = vpop.xlane.xlu0 %96
    %v98 = vrot.slane %v97, 4
    %v99 = vadd.f32 %v97, %v98
    %v100 = vrot.slane %v99, 2
    %v101 = vadd.f32 %v99, %v100
    %v102 = vrot.slane %v101, 1
    %v103 = vadd.f32 %v101, %v102
    %s104 = vtos %v103
    %v105 = vstv %s104
    %v106 = vrcp.pop %v105
    %v107 = vmul.f32 %v93, %v106
    %v108 = vsel %vm40, %v107, %v34
    %109 = vst.msk [vmem:[%s5] sm:$0x7] %vm42, %v108
    %v110 = vmul.f32 %v67, %v67
    %v111 = vmul.f32 %v69, 2.0
    %v112 = vsel %vm52, %v110, 0.0
    %113 = vadd.xlane.f32.xlu0 %v112
    %v114 = vpop.xlane.xlu0 %113
    %v115 = vrcp.pop %v114
    %v116 = vmul.f32 %v110, %v115
    %v117 = vlog2.pop %v114
    %v118 = vmul.f32 %v117, 0.6931472
    %v119 = vsub.f32 %v111, %v118
    %v120 = vsub.f32 %v119, %v81
    %v121 = vmul.f32 %v116, %v120
    %v122 = vsel %vm52, %v121, 0.0
    %123 = vadd.xlane.f32.xlu0 %v122
    %v124 = vpop.xlane.xlu0 %123
    %v125 = vrot.slane %v124, 4
    %v126 = vadd.f32 %v124, %v125
    %v127 = vrot.slane %v126, 2
    %v128 = vadd.f32 %v126, %v127
    %v129 = vrot.slane %v128, 1
    %v130 = vadd.f32 %v128, %v129
    %v131 = vmul.f32 %v130, 0.125
    %vm132 = vcmask 0
    %133 = vst.msk [vmem:[#allocation6] sm:$0x1] %vm132, %v131
    // Predicated region
    $region22: #{ours_loss_local.1} parent=1 // pred_check
      _
    $region23: #{ours_loss_local.1} parent=1 // pred_check_branch
      %135 = sbr.rel (0) target = $region25
    $region24: #{ours_loss_local.1} parent=1 // pred_region
      %s137 = ssub.s32 16, 16
      %138 = vsyncadd [#allocation5], %s137
      %s140 = sshll.u32 [#allocation6], 4
      %s141 = int_to_ptr.vmem [resolvable:$true] %s140
      %143 = dma.vmem_to_hbm [thread:$0]  %s141, 16, %s4, [#allocation5]
    $region25: #{ours_loss_local.1} parent=1 // pred_fallthru
      _
    // Predicated region
    $region26: #{ours_loss_local.1} parent=1 // pred_check
      _
    $region27: #{ours_loss_local.1} parent=1 // pred_check_branch
      %145 = sbr.rel (0) target = $region29
    $region28: #{ours_loss_local.1} parent=1 // pred_region
      _
    $region29: #{ours_loss_local.1} parent=1 // pred_fallthru
      _
    // Predicated region
    $region30: #{ours_loss_local.1} parent=1 // pred_check
      _
    $region31: #{ours_loss_local.1} parent=1 // pred_check_branch
      %147 = sbr.rel (0) target = $region33
    $region32: #{ours_loss_local.1} parent=1 // pred_region
      %148 = dma.done [#allocation5], 16
    $region33: #{ours_loss_local.1} parent=1 // pred_fallthru
      _
    // Predicated region
    $region34: #{ours_loss_local.1} parent=1 // pred_check
      _
    $region35: #{ours_loss_local.1} parent=1 // pred_check_branch
      %150 = sbr.rel (0) target = $region37
    $region36: #{ours_loss_local.1} parent=1 // pred_region
      _
    $region37: #{ours_loss_local.1} parent=1 // pred_fallthru
      _
    %151 = vsyncpa [#allocation4], 1
    %152 = vsyncpa [#allocation5], 1

</llo_original>
